<compile_context>
chip_gen: v7x
topology: tpu7x:2x2x1
jax: 0.10.0
libtpu: 0.0.40
codegen_flags: <defaults>
</compile_context>

<pallas_src>
import math

import jax
import jax.numpy as jnp
from jax.experimental import pallas as pl
from jax.experimental.pallas import tpu as pltpu

SEQUENCE_LENGTH = 50
_LANE = 128      # TPU lane width: pad all output dims to this for lane-dense vregs
_SUBLANE = 8     # TPU sublane width: batch blocks must be 8-row aligned


def _round_up(x, m):
    return (x + m - 1) // m * m


def _pad_to(a, shape):
    """Zero-pad `a` up to `shape` (no-op if already that shape)."""
    pads = tuple((0, t - s) for s, t in zip(a.shape, shape))
    if any(hi for _, hi in pads):
        return jnp.pad(a, pads)
    return a


def _ann_kernel(x_ref, w1_ref, b1_ref, w2_ref, b2_ref, w3_ref, b3_ref, o_ref):
    """Fused 3-layer MLP on one (TILE_B, flat_in) batch tile.

    Matmuls run on the MXU in bf16 with f32 accumulation; bias add + ReLU in
    f32 on the VPU. Dropout is identity at inference (eval mode).
    """
    # x arrives as f32 (saves the wrapper-side convert round trip); cast to
    # bf16 here on the VPU, which has huge slack in this HBM-bound kernel.
    x = x_ref[...].astype(w1_ref.dtype)

    # Layer 1: Linear + ReLU (output lanes zero-padded to 128 -> lane-dense h1)
    h1 = jnp.dot(x, w1_ref[...], preferred_element_type=jnp.float32)
    h1 = jnp.maximum(h1 + b1_ref[...], 0.0)

    # Layer 2: Linear + ReLU
    h2 = jnp.dot(h1.astype(w2_ref.dtype), w2_ref[...],
                 preferred_element_type=jnp.float32)
    h2 = jnp.maximum(h2 + b2_ref[...], 0.0)

    # Layer 3: Linear (logits, zero-padded to 128 output lanes -> unmasked vst)
    out = jnp.dot(h2.astype(w3_ref.dtype), w3_ref[...],
                  preferred_element_type=jnp.float32)
    o_ref[...] = (out + b3_ref[...]).astype(o_ref.dtype)


def prepare_params(params, compute_dtype=jnp.bfloat16):
    """One-time (hoisted) weight preparation.

    - Casts weights to bf16 (MXU native); keeps biases in f32.
    - Zero-pads every layer's output dim (and the matching next-layer input
      dim) up to a multiple of 128 lanes so all intermediates and the final
      logits tile are lane-dense. Zero padding is numerically exact:
      ReLU(0 + 0) = 0, and zero lanes contribute 0 to the next matmul.
    Returns (prepared_params, num_classes).
    """
    w1, b1, w2, b2, w3, b3 = params
    num_classes = w3.shape[1]
    d_in = w1.shape[0]
    h1 = _round_up(w1.shape[1], _LANE)
    h2 = _round_up(w2.shape[1], _LANE)
    c = _round_up(num_classes, _LANE)

    w1c = _pad_to(w1, (d_in, h1)).astype(compute_dtype)
    b1c = _pad_to(b1.reshape(1, -1), (1, h1)).astype(jnp.float32)
    w2c = _pad_to(w2, (h1, h2)).astype(compute_dtype)
    b2c = _pad_to(b2.reshape(1, -1), (1, h2)).astype(jnp.float32)
    w3c = _pad_to(w3, (h2, c)).astype(compute_dtype)
    b3c = _pad_to(b3.reshape(1, -1), (1, c)).astype(jnp.float32)
    return (w1c, b1c, w2c, b2c, w3c, b3c), num_classes


def ann_forward(x, prepared, *, num_classes, tile_b=2048, out_dtype=jnp.float32):
    """x: (B, SEQUENCE_LENGTH, input_size) float32. Returns (B, num_classes) f32."""
    w1c, b1c, w2c, b2c, w3c, b3c = prepared
    B = x.shape[0]
    flat_in = math.prod(x.shape[1:])
    assert flat_in == w1c.shape[0], "prepared params do not match input size"
    out_lanes = w3c.shape[1]

    # nn.Flatten: row-major flatten of all dims after batch (free reshape).
    # Stays f32 -- the bf16 cast happens inside the kernel.
    x2d = x.reshape(B, flat_in)

    # Sublane alignment only: pad B to a multiple of 8 (<=7 extra rows).
    # Ragged last batch blocks (b8 % tile_b != 0) are handled by Pallas'
    # masked edge handling, so no full pad-to-tile copy of x is needed.
    b8 = _round_up(B, _SUBLANE)
    if b8 != B:
        x2d = jnp.pad(x2d, ((0, b8 - B), (0, 0)))

    # Large batch tiles amortize the ~0.35 us/grid-step overhead; clamp so the
    # grid has >=2 steps whenever possible (lets "parallel" shard the batch
    # across both v7x TensorCores; harmless on v5e/v6e).
    tile_b = max(_SUBLANE, min(tile_b, _round_up(pl.cdiv(b8, 2), _SUBLANE)))
    grid = (pl.cdiv(b8, tile_b),)

    # Weights/biases: constant index_map -> VMEM-resident across grid steps.
    const = lambda shape: pl.BlockSpec(shape, lambda i: (0, 0))

    flops = 2 * b8 * (flat_in * w1c.shape[1]
                      + w1c.shape[1] * w2c.shape[1]
                      + w2c.shape[1] * out_lanes)
    bytes_accessed = (
        x2d.size * x2d.dtype.itemsize                               # f32 x read
        + sum(a.size * a.dtype.itemsize for a in prepared)          # weights/biases
        + b8 * out_lanes * jnp.dtype(jnp.bfloat16).itemsize)        # bf16 logits write

    out_pad = pl.pallas_call(
        _ann_kernel,
        out_shape=jax.ShapeDtypeStruct((b8, out_lanes), jnp.bfloat16),
        grid=grid,
        in_specs=[
            pl.BlockSpec((tile_b, flat_in), lambda i: (i, 0)),
            const(w1c.shape), const(b1c.shape),
            const(w2c.shape), const(b2c.shape),
            const(w3c.shape), const(b3c.shape),
        ],
        out_specs=pl.BlockSpec((tile_b, out_lanes), lambda i: (i, 0)),
        compiler_params=pltpu.CompilerParams(
            dimension_semantics=("parallel",),  # shard batch axis across TCs on v7x
        ),
        cost_estimate=pl.CostEstimate(
            flops=flops, transcendentals=0, bytes_accessed=bytes_accessed),
    )(x2d, w1c, b1c, w2c, b2c, w3c, b3c)

    # Slice off padded rows / lanes; cast the tiny (B, C) result back to f32.
    return out_pad[:B, :num_classes].astype(out_dtype)


def init_params(key, input_size, hidden_size, num_classes):
    """Deterministic parameter init. Weights stored as (in, out), biases as (1, out)."""
    flat_in = input_size * SEQUENCE_LENGTH
    dims = [(flat_in, hidden_size),
            (hidden_size, hidden_size // 2),
            (hidden_size // 2, num_classes)]
    params = []
    for i, (din, dout) in enumerate(dims):
        kw, kb = jax.random.split(jax.random.fold_in(key, i))
        bound = 1.0 / jnp.sqrt(din)  # matches nn.Linear default init range
        w = jax.random.uniform(kw, (din, dout), jnp.float32, -bound, bound)
        b = jax.random.uniform(kb, (1, dout), jnp.float32, -bound, bound)
        params.extend([w, b])
    return tuple(params)


def ann_reference(x, params, compute_dtype=jnp.float32):
    """Pure-JAX reference. With compute_dtype=bfloat16 it mirrors the kernel's casts."""
    w1, b1, w2, b2, w3, b3 = params
    h = x.reshape(x.shape[0], -1).astype(compute_dtype)
    h = jnp.maximum(
        jnp.dot(h, w1.astype(compute_dtype), preferred_element_type=jnp.float32) + b1, 0.0)
    h = jnp.maximum(
        jnp.dot(h.astype(compute_dtype), w2.astype(compute_dtype),
                preferred_element_type=jnp.float32) + b2, 0.0)
    return jnp.dot(h.astype(compute_dtype), w3.astype(compute_dtype),
                   preferred_element_type=jnp.float32) + b3


if __name__ == "__main__":
    # Shapes consistent with the module: input_size=4 sensors, SEQUENCE_LENGTH=50
    # time steps, hidden=32, 3 classes, batch=2.
    batch, input_size, hidden_size, num_classes = 2, 4, 32, 3

    key = jax.random.PRNGKey(0)
    kx, kp = jax.random.split(key)
    x = jax.random.normal(kx, (batch, SEQUENCE_LENGTH, input_size), jnp.float32)
    params = init_params(kp, input_size, hidden_size, num_classes)

    # One-time weight prep (bf16 cast + lane padding), hoisted out of the call path.
    prepared, nc = prepare_params(params)
    fwd = jax.jit(lambda xx, pp: ann_forward(xx, pp, num_classes=nc))

    out = jax.block_until_ready(fwd(x, prepared))

    # References: same cast pattern as the kernel (bf16 matmuls, f32 acc, bf16 store)
    # and true-f32 semantics.
    ref_bf16 = ann_reference(x, params, compute_dtype=jnp.bfloat16)
    ref_bf16 = ref_bf16.astype(jnp.bfloat16).astype(jnp.float32)
    ref_f32 = ann_reference(x, params, compute_dtype=jnp.float32)

    assert out.shape == (batch, num_classes)
    assert jnp.allclose(out, ref_bf16, atol=2e-2, rtol=2e-2), "mismatch vs bf16 reference"
    assert jnp.allclose(out, ref_f32, atol=5e-2, rtol=5e-2), "mismatch vs f32 reference"
    print("KERNEL_OK")
</pallas_src>

<mosaic_0001>
module attributes {stable_mosaic.version = 11 : i64} {
  func.func @_ann_kernel(%arg0: i32, %arg1: memref<8x200xf32, #tpu.memory_space<vmem>>, %arg2: memref<200x128xbf16, #tpu.memory_space<vmem>>, %arg3: memref<1x128xf32, #tpu.memory_space<vmem>>, %arg4: memref<128x128xbf16, #tpu.memory_space<vmem>>, %arg5: memref<1x128xf32, #tpu.memory_space<vmem>>, %arg6: memref<128x128xbf16, #tpu.memory_space<vmem>>, %arg7: memref<1x128xf32, #tpu.memory_space<vmem>>, %arg8: memref<8x128xbf16, #tpu.memory_space<vmem>>) attributes {dimension_semantics = [#tpu.dimension_semantics<parallel>], iteration_bounds = array<i64: 1>, scalar_prefetch = 0 : i64, scratch_operands = 0 : i64, tpu.core_type = #tpu.core_type<tc>, window_params = [{transform_indices = @transform_0, window_bounds = array<i64: 8, 200>}, {pipeline_mode = #tpu.pipeline_mode<synchronous>, transform_indices = @transform_1, window_bounds = array<i64: 200, 128>}, {pipeline_mode = #tpu.pipeline_mode<synchronous>, transform_indices = @transform_2, window_bounds = array<i64: 1, 128>}, {pipeline_mode = #tpu.pipeline_mode<synchronous>, transform_indices = @transform_3, window_bounds = array<i64: 128, 128>}, {pipeline_mode = #tpu.pipeline_mode<synchronous>, transform_indices = @transform_4, window_bounds = array<i64: 1, 128>}, {pipeline_mode = #tpu.pipeline_mode<synchronous>, transform_indices = @transform_5, window_bounds = array<i64: 128, 128>}, {pipeline_mode = #tpu.pipeline_mode<synchronous>, transform_indices = @transform_6, window_bounds = array<i64: 1, 128>}, {transform_indices = @transform_7, window_bounds = array<i64: 8, 128>}]} {
    %c0 = arith.constant 0 : index
    %c0_0 = arith.constant 0 : index
    %0 = vector.load %arg1[%c0, %c0_0] : memref<8x200xf32, #tpu.memory_space<vmem>>, vector<8x200xf32>
    %1 = arith.truncf %0 : vector<8x200xf32> to vector<8x200xbf16>
    %c0_1 = arith.constant 0 : index
    %c0_2 = arith.constant 0 : index
    %2 = vector.load %arg2[%c0_1, %c0_2] : memref<200x128xbf16, #tpu.memory_space<vmem>>, vector<200x128xbf16>
    %cst = arith.constant dense<0.000000e+00> : vector<8x128xf32>
    %3 = tpu.matmul %1, %2, %cst {dimension_numbers = #tpu.dot_dimension_numbers<[1], [0], [0], [1], [0, 0, 1, 1], [], []>} : vector<8x200xbf16>, vector<200x128xbf16>, vector<8x128xf32> -> vector<8x128xf32>
    %c0_3 = arith.constant 0 : index
    %c0_4 = arith.constant 0 : index
    %4 = vector.load %arg3[%c0_3, %c0_4] : memref<1x128xf32, #tpu.memory_space<vmem>>, vector<1x128xf32>
    %5 = vector.broadcast %4 : vector<1x128xf32> to vector<8x128xf32>
    %6 = arith.addf %3, %5 : vector<8x128xf32>
    %cst_5 = arith.constant 0.000000e+00 : f32
    %7 = vector.broadcast %cst_5 : f32 to vector<8x128xf32>
    %8 = arith.maximumf %6, %7 : vector<8x128xf32>
    %9 = arith.truncf %8 : vector<8x128xf32> to vector<8x128xbf16>
    %c0_6 = arith.constant 0 : index
    %c0_7 = arith.constant 0 : index
    %10 = vector.load %arg4[%c0_6, %c0_7] : memref<128x128xbf16, #tpu.memory_space<vmem>>, vector<128x128xbf16>
    %cst_8 = arith.constant dense<0.000000e+00> : vector<8x128xf32>
    %11 = tpu.matmul %9, %10, %cst_8 {dimension_numbers = #tpu.dot_dimension_numbers<[1], [0], [0], [1], [0, 0, 1, 1], [], []>} : vector<8x128xbf16>, vector<128x128xbf16>, vector<8x128xf32> -> vector<8x128xf32>
    %c0_9 = arith.constant 0 : index
    %c0_10 = arith.constant 0 : index
    %12 = vector.load %arg5[%c0_9, %c0_10] : memref<1x128xf32, #tpu.memory_space<vmem>>, vector<1x128xf32>
    %13 = vector.broadcast %12 : vector<1x128xf32> to vector<8x128xf32>
    %14 = arith.addf %11, %13 : vector<8x128xf32>
    %cst_11 = arith.constant 0.000000e+00 : f32
    %15 = vector.broadcast %cst_11 : f32 to vector<8x128xf32>
    %16 = arith.maximumf %14, %15 : vector<8x128xf32>
    %17 = arith.truncf %16 : vector<8x128xf32> to vector<8x128xbf16>
    %c0_12 = arith.constant 0 : index
    %c0_13 = arith.constant 0 : index
    %18 = vector.load %arg6[%c0_12, %c0_13] : memref<128x128xbf16, #tpu.memory_space<vmem>>, vector<128x128xbf16>
    %cst_14 = arith.constant dense<0.000000e+00> : vector<8x128xf32>
    %19 = tpu.matmul %17, %18, %cst_14 {dimension_numbers = #tpu.dot_dimension_numbers<[1], [0], [0], [1], [0, 0, 1, 1], [], []>} : vector<8x128xbf16>, vector<128x128xbf16>, vector<8x128xf32> -> vector<8x128xf32>
    %c0_15 = arith.constant 0 : index
    %c0_16 = arith.constant 0 : index
    %20 = vector.load %arg7[%c0_15, %c0_16] : memref<1x128xf32, #tpu.memory_space<vmem>>, vector<1x128xf32>
    %21 = vector.broadcast %20 : vector<1x128xf32> to vector<8x128xf32>
    %22 = arith.addf %19, %21 : vector<8x128xf32>
    %23 = arith.truncf %22 : vector<8x128xf32> to vector<8x128xbf16>
    %c0_17 = arith.constant 0 : index
    %c0_18 = arith.constant 0 : index
    %24 = vector.load %arg8[%c0_17, %c0_18] : memref<8x128xbf16, #tpu.memory_space<vmem>>, vector<8x128xbf16>
    tpu.vector_store %arg8[%c0_17, %c0_18], %23 {strides = array<i32>} : memref<8x128xbf16, #tpu.memory_space<vmem>>, vector<8x128xbf16>,
    return
  }
  func.func @transform_0(%arg0: i32) -> (i32, i32) {
    %c0_i32 = arith.constant 0 : i32
    %c0_i32_0 = arith.constant 0 : i32
    return %arg0, %c0_i32 : i32, i32
  }
  func.func @transform_1(%arg0: i32) -> (i32, i32) {
    %c0_i32 = arith.constant 0 : i32
    %c0_i32_0 = arith.constant 0 : i32
    %c0_i32_1 = arith.constant 0 : i32
    return %c0_i32, %c0_i32_0 : i32, i32
  }
  func.func @transform_2(%arg0: i32) -> (i32, i32) {
    %c0_i32 = arith.constant 0 : i32
    %c0_i32_0 = arith.constant 0 : i32
    %c0_i32_1 = arith.constant 0 : i32
    return %c0_i32, %c0_i32_0 : i32, i32
  }
  func.func @transform_3(%arg0: i32) -> (i32, i32) {
    %c0_i32 = arith.constant 0 : i32
    %c0_i32_0 = arith.constant 0 : i32
    %c0_i32_1 = arith.constant 0 : i32
    return %c0_i32, %c0_i32_0 : i32, i32
  }
  func.func @transform_4(%arg0: i32) -> (i32, i32) {
    %c0_i32 = arith.constant 0 : i32
    %c0_i32_0 = arith.constant 0 : i32
    %c0_i32_1 = arith.constant 0 : i32
    return %c0_i32, %c0_i32_0 : i32, i32
  }
  func.func @transform_5(%arg0: i32) -> (i32, i32) {
    %c0_i32 = arith.constant 0 : i32
    %c0_i32_0 = arith.constant 0 : i32
    %c0_i32_1 = arith.constant 0 : i32
    return %c0_i32, %c0_i32_0 : i32, i32
  }
  func.func @transform_6(%arg0: i32) -> (i32, i32) {
    %c0_i32 = arith.constant 0 : i32
    %c0_i32_0 = arith.constant 0 : i32
    %c0_i32_1 = arith.constant 0 : i32
    return %c0_i32, %c0_i32_0 : i32, i32
  }
  func.func @transform_7(%arg0: i32) -> (i32, i32) {
    %c0_i32 = arith.constant 0 : i32
    %c0_i32_0 = arith.constant 0 : i32
    return %arg0, %c0_i32 : i32, i32
  }
}

</mosaic_0001>

<llo_original>
// kernel: _lambda_.1
$region0: #{_lambda_.1}
  #allocation0 [shape = 'u32[]', space=smem, size = 0x4, offset = 0x4, fixed_abs, tag = 'smem constant byte address 0x4 - core index']
  #allocation1 [shape = 'u32[144,128]{1,0:T(1,128)}', space=vmem, size = 0x12000, scoped, tag = 'internal scratch']
  %s0 = inlined_call_operand.vmem [shape: f32[8,200], index: 0, kind: input, shape index: {}]
  %s1 = inlined_call_operand.vmem [shape: bf16[200,128], index: 1, kind: input, shape index: {}]
  %s2 = inlined_call_operand.vmem [shape: f32[1,128], index: 2, kind: input, shape index: {}]
  %s3 = inlined_call_operand.vmem [shape: bf16[128,128], index: 3, kind: input, shape index: {}]
  %s4 = inlined_call_operand.vmem [shape: f32[1,128], index: 4, kind: input, shape index: {}]
  %s5 = inlined_call_operand.vmem [shape: bf16[128,128], index: 5, kind: input, shape index: {}]
  %s6 = inlined_call_operand.vmem [shape: f32[1,128], index: 6, kind: input, shape index: {}]
  %s7 = inlined_call_operand.vmem [shape: bf16[8,128], index: 7, kind: output, shape index: {}]
  %s8 = sld [smem:[#allocation0]]
  $region38: #{_lambda_.1} parent=0
    _
  %s10 = ssub.s32 1, %s8
  %s11 = scalar_select 0, %s10, %s8
  // Predicated region
  $region2: #{_lambda_.1} parent=0 // pred_check
    _
  $region3: #{_lambda_.1} parent=0 // pred_check_branch
    %13 = sbr.rel (0) target = $region5
  $region4: #{_lambda_.1} parent=0 // pred_region
    _
  $region5: #{_lambda_.1} parent=0 // pred_fallthru
    _
  // Predicated region
  $region6: #{_lambda_.1} parent=0 // pred_check
    _
  $region7: #{_lambda_.1} parent=0 // pred_check_branch
    %15 = sbr.rel (0) target = $region9
  $region8: #{_lambda_.1} parent=0 // pred_region
    _
  $region9: #{_lambda_.1} parent=0 // pred_fallthru
    _
  // Predicated region
  $region10: #{_lambda_.1} parent=0 // pred_check
    _
  $region11: #{_lambda_.1} parent=0 // pred_check_branch
    %17 = sbr.rel (0) target = $region13
  $region12: #{_lambda_.1} parent=0 // pred_region
    _
  $region13: #{_lambda_.1} parent=0 // pred_fallthru
    _
  // Predicated region
  $region14: #{_lambda_.1} parent=0 // pred_check
    _
  $region15: #{_lambda_.1} parent=0 // pred_check_branch
    %19 = sbr.rel (0) target = $region17
  $region16: #{_lambda_.1} parent=0 // pred_region
    _
  $region17: #{_lambda_.1} parent=0 // pred_fallthru
    _
  // Predicated region
  $region18: #{_lambda_.1} parent=0 // pred_check
    _
  $region19: #{_lambda_.1} parent=0 // pred_check_branch
    %21 = sbr.rel (0) target = $region21
  $region20: #{_lambda_.1} parent=0 // pred_region
    _
  $region21: #{_lambda_.1} parent=0 // pred_fallthru
    _
  // Predicated region
  $region22: #{_lambda_.1} parent=0 // pred_check
    _
  $region23: #{_lambda_.1} parent=0 // pred_check_branch
    %23 = sbr.rel (0) target = $region25
  $region24: #{_lambda_.1} parent=0 // pred_region
    _
  $region25: #{_lambda_.1} parent=0 // pred_fallthru
    _
  // Predicated region
  $region26: #{_lambda_.1} parent=0 // pred_check
    _
  $region27: #{_lambda_.1} parent=0 // pred_check_branch
    %25 = sbr.rel (0) target = $region29
  $region28: #{_lambda_.1} parent=0 // pred_region
    _
  $region29: #{_lambda_.1} parent=0 // pred_fallthru
    _
  %v27 = vld [vmem:[%s0] sm:$0xff]
  %v28 = vld [vmem:[%s0 + $0x8] sm:$0xff]
  %v29 = vpack.c.bf16 %v27, %v27
  %v30 = vpack.c.bf16 %v28, %v28
  %v31 = vld [vmem:[%s1] sm:$0xf]
  %v32 = vld [vmem:[%s1 + $0x4] sm:$0xf]
  %v33 = vld [vmem:[%s1 + $0x8] sm:$0xf]
  %v34 = vld [vmem:[%s1 + $0xc] sm:$0xf]
  %v35 = vld [vmem:[%s1 + $0x10] sm:$0xf]
  %v36 = vld [vmem:[%s1 + $0x14] sm:$0xf]
  %v37 = vld [vmem:[%s1 + $0x18] sm:$0xf]
  %v38 = vld [vmem:[%s1 + $0x1c] sm:$0xf]
  %v39 = vld [vmem:[%s1 + $0x20] sm:$0xf]
  %v40 = vld [vmem:[%s1 + $0x24] sm:$0xf]
  %v41 = vld [vmem:[%s1 + $0x28] sm:$0xf]
  %v42 = vld [vmem:[%s1 + $0x2c] sm:$0xf]
  %v43 = vld [vmem:[%s1 + $0x30] sm:$0xf]
  %v44 = vld [vmem:[%s1 + $0x34] sm:$0xf]
  %v45 = vld [vmem:[%s1 + $0x38] sm:$0xf]
  %v46 = vld [vmem:[%s1 + $0x3c] sm:$0xf]
  %v47 = vld [vmem:[%s1 + $0x40] sm:$0xf]
  %v48 = vld [vmem:[%s1 + $0x44] sm:$0xf]
  %v49 = vld [vmem:[%s1 + $0x48] sm:$0xf]
  %v50 = vld [vmem:[%s1 + $0x4c] sm:$0xf]
  %v51 = vld [vmem:[%s1 + $0x50] sm:$0xf]
  %v52 = vld [vmem:[%s1 + $0x54] sm:$0xf]
  %v53 = vld [vmem:[%s1 + $0x58] sm:$0xf]
  %v54 = vld [vmem:[%s1 + $0x5c] sm:$0xf]
  %v55 = vld [vmem:[%s1 + $0x60] sm:$0xf]
  %v56 = vld [vmem:[%s2] sm:$0x1]
  %v58 = vlaneseq
  %v59 = vshrl.u32 %v58, 7
  %v60 = vsub.s32 0, %v59
  %v61 = vrot.slane %v56, %v60
  %v88 = vunpack.c.l.b16 %v31
  %v89 = vunpack.c.l.b16 %v32
  %v90 = vunpack.c.l.b16 %v33
  %v91 = vunpack.c.l.b16 %v34
  %v92 = vunpack.c.l.b16 %v35
  %v93 = vunpack.c.l.b16 %v36
  %v94 = vunpack.c.l.b16 %v37
  %v95 = vunpack.c.l.b16 %v38
  %v96 = vunpack.c.l.b16 %v39
  %v97 = vunpack.c.l.b16 %v40
  %v98 = vunpack.c.l.b16 %v41
  %v99 = vunpack.c.l.b16 %v42
  %v100 = vunpack.c.l.b16 %v43
  %v101 = vunpack.c.l.b16 %v44
  %v102 = vunpack.c.l.b16 %v45
  %v103 = vunpack.c.l.b16 %v46
  %v104 = vunpack.c.l.b16 %v47
  %v105 = vunpack.c.l.b16 %v48
  %v106 = vunpack.c.l.b16 %v49
  %v107 = vunpack.c.l.b16 %v50
  %v108 = vunpack.c.l.b16 %v51
  %v109 = vunpack.c.l.b16 %v52
  %v110 = vunpack.c.l.b16 %v53
  %v111 = vunpack.c.l.b16 %v54
  %v112 = vunpack.c.l.b16 %v55
  %v113 = vpack.c.b16 %v89, %v88
  %v114 = vpack.c.b16 %v91, %v90
  %v115 = vpack.c.b16 %v93, %v92
  %v116 = vpack.c.b16 %v95, %v94
  %v117 = vpack.c.b16 %v97, %v96
  %v118 = vpack.c.b16 %v99, %v98
  %v119 = vpack.c.b16 %v101, %v100
  %v120 = vpack.c.b16 %v103, %v102
  %v121 = vpack.c.b16 %v105, %v104
  %v122 = vpack.c.b16 %v107, %v106
  %v123 = vpack.c.b16 %v109, %v108
  %v124 = vpack.c.b16 %v111, %v110
  %v125 = vpack.c.b16 %v112, %v112
  %vm138 = vcmask 588800
  %v140 = vsel %vm138, %v30, 0
  %vm142 = vcmask 1043456
  %v144 = vsel %vm142, %v125, 0
  %146 = vmatprep.subr.bf16.mxu0 0
  %147 = vmatpush1.bf16.msra.mxu0 %v113
  %148 = vmatprep.subr.bf16.mxu0 0
  %149 = vmatpush1.bf16.msra.mxu0 %v114
  %150 = vmatprep.subr.bf16.mxu0 0
  %151 = vmatpush1.bf16.msra.mxu0 %v115
  %152 = vmatprep.subr.bf16.mxu0 0
  %153 = vmatpush1.bf16.msra.mxu0 %v116
  %154 = vmatprep.subr.bf16.mxu0 0
  %155 = vmatpush1.bf16.msra.mxu0 %v117
  %156 = vmatprep.subr.bf16.mxu0 0
  %157 = vmatpush1.bf16.msra.mxu0 %v118
  %158 = vmatprep.subr.bf16.mxu0 0
  %159 = vmatpush1.bf16.msra.mxu0 %v119
  %160 = vmatprep.subr.bf16.mxu0 0
  %161 = vmatpush1.bf16.msra.mxu0 %v120
  %162 = vmatprep.subr.bf16.mxu0 0
  %163 = vmatpush1.bf16.msra.mxu0 %v121
  %164 = vmatprep.subr.bf16.mxu0 0
  %165 = vmatpush1.bf16.msra.mxu0 %v122
  %166 = vmatprep.subr.bf16.mxu0 0
  %167 = vmatpush1.bf16.msra.mxu0 %v123
  %168 = vmatprep.subr.bf16.mxu0 0
  %169 = vmatpush1.bf16.msra.mxu0 %v124
  %170 = vmatprep.subr.bf16.mxu0 0
  %171 = vmatpush1.bf16.msra.mxu0 %v144
  %172 = vmatprep.subr.bf16.mxu0 0
  %173 = vmatpush1.bf16.msra.mxu0 0
  %174 = vmatprep.subr.bf16.mxu0 0
  %175 = vmatpush1.bf16.msra.mxu0 0
  %176 = vmatprep.subr.bf16.mxu0 0
  %177 = vmatpush1.bf16.msra.mxu0 0
  %178 = vmatprep.mubr.bf16.mxu0 %v140
  %179 = vmatmul.mubr.bf16.gmra.mrb[0].mxu0 %v29
  %v180 = vpop.f32.mrb[0].mxu0
  %v181 = vadd.f32 %v61, %v180
  %v182 = vpop.f32.mrb[0].mxu0
  %v183 = vpop.f32.mrb[0].mxu0
  %v184 = vpop.f32.mrb[0].mxu0
  %185 = vdwg.mxu0
  %v186 = vmax.f32 %v181, 0.0
  %v187 = vpack.c.bf16 %v186, %v186
  %v188 = vld [vmem:[%s3] sm:$0xf]
  %v189 = vld [vmem:[%s3 + $0x4] sm:$0xf]
  %v190 = vld [vmem:[%s3 + $0x8] sm:$0xf]
  %v191 = vld [vmem:[%s3 + $0xc] sm:$0xf]
  %v192 = vld [vmem:[%s3 + $0x10] sm:$0xf]
  %v193 = vld [vmem:[%s3 + $0x14] sm:$0xf]
  %v194 = vld [vmem:[%s3 + $0x18] sm:$0xf]
  %v195 = vld [vmem:[%s3 + $0x1c] sm:$0xf]
  %v196 = vld [vmem:[%s3 + $0x20] sm:$0xf]
  %v197 = vld [vmem:[%s3 + $0x24] sm:$0xf]
  %v198 = vld [vmem:[%s3 + $0x28] sm:$0xf]
  %v199 = vld [vmem:[%s3 + $0x2c] sm:$0xf]
  %v200 = vld [vmem:[%s3 + $0x30] sm:$0xf]
  %v201 = vld [vmem:[%s3 + $0x34] sm:$0xf]
  %v202 = vld [vmem:[%s3 + $0x38] sm:$0xf]
  %v203 = vld [vmem:[%s3 + $0x3c] sm:$0xf]
  %v204 = vld [vmem:[%s4] sm:$0x1]
  %v206 = vlaneseq
  %v207 = vshrl.u32 %v206, 7
  %v208 = vsub.s32 0, %v207
  %v209 = vrot.slane %v204, %v208
  %v227 = vunpack.c.l.b16 %v188
  %v228 = vunpack.c.l.b16 %v189
  %v229 = vunpack.c.l.b16 %v190
  %v230 = vunpack.c.l.b16 %v191
  %v231 = vunpack.c.l.b16 %v192
  %v232 = vunpack.c.l.b16 %v193
  %v233 = vunpack.c.l.b16 %v194
  %v234 = vunpack.c.l.b16 %v195
  %v235 = vunpack.c.l.b16 %v196
  %v236 = vunpack.c.l.b16 %v197
  %v237 = vunpack.c.l.b16 %v198
  %v238 = vunpack.c.l.b16 %v199
  %v239 = vunpack.c.l.b16 %v200
  %v240 = vunpack.c.l.b16 %v201
  %v241 = vunpack.c.l.b16 %v202
  %v242 = vunpack.c.l.b16 %v203
  %v243 = vpack.c.b16 %v228, %v227
  %v244 = vpack.c.b16 %v230, %v229
  %v245 = vpack.c.b16 %v232, %v231
  %v246 = vpack.c.b16 %v234, %v233
  %v247 = vpack.c.b16 %v236, %v235
  %v248 = vpack.c.b16 %v238, %v237
  %v249 = vpack.c.b16 %v240, %v239
  %v250 = vpack.c.b16 %v242, %v241
  %259 = vmatprep.subr.bf16.mxu0 0
  %260 = vmatpush1.bf16.msra.mxu0 %v243
  %261 = vmatprep.subr.bf16.mxu0 0
  %262 = vmatpush1.bf16.msra.mxu0 %v244
  %263 = vmatprep.subr.bf16.mxu0 0
  %264 = vmatpush1.bf16.msra.mxu0 %v245
  %265 = vmatprep.subr.bf16.mxu0 0
  %266 = vmatpush1.bf16.msra.mxu0 %v246
  %267 = vmatprep.subr.bf16.mxu0 0
  %268 = vmatpush1.bf16.msra.mxu0 %v247
  %269 = vmatprep.subr.bf16.mxu0 0
  %270 = vmatpush1.bf16.msra.mxu0 %v248
  %271 = vmatprep.subr.bf16.mxu0 0
  %272 = vmatpush1.bf16.msra.mxu0 %v249
  %273 = vmatprep.subr.bf16.mxu0 0
  %274 = vmatpush1.bf16.msra.mxu0 %v250
  %275 = vmatprep.subr.bf16.mxu0 0
  %276 = vmatpush1.bf16.msra.mxu0 0
  %277 = vmatprep.subr.bf16.mxu0 0
  %278 = vmatpush1.bf16.msra.mxu0 0
  %279 = vmatprep.subr.bf16.mxu0 0
  %280 = vmatpush1.bf16.msra.mxu0 0
  %281 = vmatprep.subr.bf16.mxu0 0
  %282 = vmatpush1.bf16.msra.mxu0 0
  %283 = vmatprep.subr.bf16.mxu0 0
  %284 = vmatpush1.bf16.msra.mxu0 0
  %285 = vmatprep.subr.bf16.mxu0 0
  %286 = vmatpush1.bf16.msra.mxu0 0
  %287 = vmatprep.subr.bf16.mxu0 0
  %288 = vmatpush1.bf16.msra.mxu0 0
  %289 = vmatprep.subr.bf16.mxu0 0
  %290 = vmatpush1.bf16.msra.mxu0 0
  %291 = vmatprep.mubr.bf16.mxu0 0
  %292 = vmatmul.mubr.bf16.gmra.mrb[0].mxu0 %v187
  %v293 = vpop.f32.mrb[0].mxu0
  %v294 = vadd.f32 %v209, %v293
  %v295 = vpop.f32.mrb[0].mxu0
  %v296 = vpop.f32.mrb[0].mxu0
  %v297 = vpop.f32.mrb[0].mxu0
  %298 = vdwg.mxu0
  %v299 = vmax.f32 %v294, 0.0
  %v300 = vpack.c.bf16 %v299, %v299
  %v301 = vld [vmem:[%s5] sm:$0xf]
  %v302 = vld [vmem:[%s5 + $0x4] sm:$0xf]
  %v303 = vld [vmem:[%s5 + $0x8] sm:$0xf]
  %v304 = vld [vmem:[%s5 + $0xc] sm:$0xf]
  %v305 = vld [vmem:[%s5 + $0x10] sm:$0xf]
  %v306 = vld [vmem:[%s5 + $0x14] sm:$0xf]
  %v307 = vld [vmem:[%s5 + $0x18] sm:$0xf]
  %v308 = vld [vmem:[%s5 + $0x1c] sm:$0xf]
  %v309 = vld [vmem:[%s5 + $0x20] sm:$0xf]
  %v310 = vld [vmem:[%s5 + $0x24] sm:$0xf]
  %v311 = vld [vmem:[%s5 + $0x28] sm:$0xf]
  %v312 = vld [vmem:[%s5 + $0x2c] sm:$0xf]
  %v313 = vld [vmem:[%s5 + $0x30] sm:$0xf]
  %v314 = vld [vmem:[%s5 + $0x34] sm:$0xf]
  %v315 = vld [vmem:[%s5 + $0x38] sm:$0xf]
  %v316 = vld [vmem:[%s5 + $0x3c] sm:$0xf]
  %v317 = vld [vmem:[%s6] sm:$0x1]
  %v319 = vlaneseq
  %v320 = vshrl.u32 %v319, 7
  %v321 = vsub.s32 0, %v320
  %v322 = vrot.slane %v317, %v321
  %v340 = vunpack.c.l.b16 %v301
  %v341 = vunpack.c.l.b16 %v302
  %v342 = vunpack.c.l.b16 %v303
  %v343 = vunpack.c.l.b16 %v304
  %v344 = vunpack.c.l.b16 %v305
  %v345 = vunpack.c.l.b16 %v306
  %v346 = vunpack.c.l.b16 %v307
  %v347 = vunpack.c.l.b16 %v308
  %v348 = vunpack.c.l.b16 %v309
  %v349 = vunpack.c.l.b16 %v310
  %v350 = vunpack.c.l.b16 %v311
  %v351 = vunpack.c.l.b16 %v312
  %v352 = vunpack.c.l.b16 %v313
  %v353 = vunpack.c.l.b16 %v314
  %v354 = vunpack.c.l.b16 %v315
  %v355 = vunpack.c.l.b16 %v316
  %v356 = vpack.c.b16 %v341, %v340
  %v357 = vpack.c.b16 %v343, %v342
  %v358 = vpack.c.b16 %v345, %v344
  %v359 = vpack.c.b16 %v347, %v346
  %v360 = vpack.c.b16 %v349, %v348
  %v361 = vpack.c.b16 %v351, %v350
  %v362 = vpack.c.b16 %v353, %v352
  %v363 = vpack.c.b16 %v355, %v354
  %372 = vmatprep.subr.bf16.mxu0 0
  %373 = vmatpush1.bf16.msra.mxu0 %v356
  %374 = vmatprep.subr.bf16.mxu0 0
  %375 = vmatpush1.bf16.msra.mxu0 %v357
  %376 = vmatprep.subr.bf16.mxu0 0
  %377 = vmatpush1.bf16.msra.mxu0 %v358
  %378 = vmatprep.subr.bf16.mxu0 0
  %379 = vmatpush1.bf16.msra.mxu0 %v359
  %380 = vmatprep.subr.bf16.mxu0 0
  %381 = vmatpush1.bf16.msra.mxu0 %v360
  %382 = vmatprep.subr.bf16.mxu0 0
  %383 = vmatpush1.bf16.msra.mxu0 %v361
  %384 = vmatprep.subr.bf16.mxu0 0
  %385 = vmatpush1.bf16.msra.mxu0 %v362
  %386 = vmatprep.subr.bf16.mxu0 0
  %387 = vmatpush1.bf16.msra.mxu0 %v363
  %388 = vmatprep.subr.bf16.mxu0 0
  %389 = vmatpush1.bf16.msra.mxu0 0
  %390 = vmatprep.subr.bf16.mxu0 0
  %391 = vmatpush1.bf16.msra.mxu0 0
  %392 = vmatprep.subr.bf16.mxu0 0
  %393 = vmatpush1.bf16.msra.mxu0 0
  %394 = vmatprep.subr.bf16.mxu0 0
  %395 = vmatpush1.bf16.msra.mxu0 0
  %396 = vmatprep.subr.bf16.mxu0 0
  %397 = vmatpush1.bf16.msra.mxu0 0
  %398 = vmatprep.subr.bf16.mxu0 0
  %399 = vmatpush1.bf16.msra.mxu0 0
  %400 = vmatprep.subr.bf16.mxu0 0
  %401 = vmatpush1.bf16.msra.mxu0 0
  %402 = vmatprep.subr.bf16.mxu0 0
  %403 = vmatpush1.bf16.msra.mxu0 0
  %404 = vmatprep.mubr.bf16.mxu0 0
  %405 = vmatmul.mubr.bf16.gmra.mrb[0].mxu0 %v300
  %v406 = vpop.f32.mrb[0].mxu0
  %v407 = vadd.f32 %v322, %v406
  %v408 = vpop.f32.mrb[0].mxu0
  %v409 = vpop.f32.mrb[0].mxu0
  %v410 = vpop.f32.mrb[0].mxu0
  %411 = vdwg.mxu0
  %v412 = vpack.c.bf16 %v407, %v407
  %413 = vst [vmem:[%s7] sm:$0xf] %v412
  // Predicated region
  $region30: #{_lambda_.1} parent=0 // pred_check
    _
  $region31: #{_lambda_.1} parent=0 // pred_check_branch
    %415 = sbr.rel (0) target = $region33
  $region32: #{_lambda_.1} parent=0 // pred_region
    _
  $region33: #{_lambda_.1} parent=0 // pred_fallthru
    _
  // Predicated region
  $region34: #{_lambda_.1} parent=0 // pred_check
    _
  $region35: #{_lambda_.1} parent=0 // pred_check_branch
    %417 = sbr.rel (0) target = $region37
  $region36: #{_lambda_.1} parent=0 // pred_region
    _
  $region37: #{_lambda_.1} parent=0 // pred_fallthru
    _

</llo_original>
